<compile_context>
chip_gen: v6e
topology: v6e:2x2x1
jax: 0.10.0
libtpu: 0.0.40
codegen_flags: <defaults>
</compile_context>

<pallas_src>
import jax
import jax.numpy as jnp
from jax.experimental import pallas as pl
from jax.experimental.pallas import tpu as pltpu

_F32_INFO = jnp.finfo(jnp.float32)
# Keep imputed features inside the bf16-finite range so the hi/lo split below
# stays finite even for (pathological) +/-inf raw features; such rows end up
# clamped exactly the way torch.nan_to_num would clamp their +/-inf products.
_FEAT_CLAMP = float(jnp.finfo(jnp.bfloat16).max)


def _round_up(x, m):
    return ((x + m - 1) // m) * m


def stype_encoder_kernel(feat_ref, mean_ref, expand_ref, wflat_ref, bflat_ref,
                         out_ref):
    # feat_ref   : [TB, C]     one batch tile of raw features (may contain NaN)
    # mean_ref   : [1,  C]     per-column StatType.MEAN fill values
    # expand_ref : [C,  C*D]   0/1 block selector, expand[c, c*D + d] = 1
    # wflat_ref  : [1,  C*D]   W[c, d] flattened to lane index c*D + d
    # bflat_ref  : [1,  C*D]   bias[c, d] flattened to lane index c*D + d
    # out_ref    : [TB, C*D]   lane-dense output tile
    feat = feat_ref[...]

    # --- na_forward (NAStrategy.MEAN): NaN in column c -> mean[c] -------------
    feat = jnp.where(jnp.isnan(feat), mean_ref[...], feat)
    # Guard for the hi/lo split (no-op for all finite, sane feature values).
    feat = jnp.clip(feat, -_FEAT_CLAMP, _FEAT_CLAMP)

    # --- lane-dense expansion on the MXU: feat_exp[b, c*D + d] = feat[b, c] ---
    # hi is exactly bf16-representable and the selector is 0/1, so the first
    # dot is exact even if the MXU truncates to bf16; lo carries the residual.
    expand = expand_ref[...]
    hi = feat.astype(jnp.bfloat16).astype(jnp.float32)
    lo = feat - hi
    feat_exp = (jnp.dot(hi, expand, preferred_element_type=jnp.float32) +
                jnp.dot(lo, expand, preferred_element_type=jnp.float32))

    # --- encode_forward (LinearEncoder): x = feat * W + bias ------------------
    x = feat_exp * wflat_ref[...] + bflat_ref[...]

    # --- torch.nan_to_num(x, nan=0): NaN -> 0, +inf -> f32 max, -inf -> f32 min
    x = jnp.where(jnp.isnan(x), jnp.float32(0.0), x)
    x = jnp.clip(x, _F32_INFO.min, _F32_INFO.max)

    # --- post_forward: post_module is None -> identity ------------------------
    out_ref[...] = x.astype(out_ref.dtype)


def _vmem_budget_bytes():
    """~Half of physical VMEM per core: 64 MiB on v5e/v6e, 32 MiB on v7x."""
    try:
        info = pltpu.get_tpu_info()
        physical = int(getattr(info, "vmem_capacity_bytes"))
    except Exception:
        physical = 64 << 20          # conservative fallback (v7x-sized VMEM)
    return physical // 2


def stype_encoder_forward(feat, col_means, weight, bias, *, batch_tile=None,
                          out_dtype=jnp.float32):
    """feat: [B, C] float32 (may contain NaN); returns [B, C, D] `out_dtype`."""
    B, C = feat.shape
    C_w, D = weight.shape
    assert C_w == C and bias.shape == (C, D)
    CD = C * D

    vmem_budget = _vmem_budget_bytes()
    if batch_tile is None:
        # ~10 live [TB, C*D] f32 slabs (double-buffered output + matmul and
        # elementwise temporaries) must fit the budget; cap at 2048 rows.
        batch_tile = max(64, min(2048, (vmem_budget // (10 * CD * 4)) // 8 * 8))
    tile = min(_round_up(max(int(batch_tile), 1), 8), _round_up(B, 8))
    B_pad = _round_up(B, tile)

    feat = feat.astype(jnp.float32)
    if B_pad != B:
        feat = jnp.pad(feat, ((0, B_pad - B), (0, 0)))   # padded rows discarded

    mean2d = col_means.reshape(1, C).astype(jnp.float32)
    wflat = weight.reshape(1, CD).astype(jnp.float32)
    bflat = bias.reshape(1, CD).astype(jnp.float32)
    col_of_lane = jnp.arange(CD, dtype=jnp.int32) // D
    expand = (col_of_lane[None, :] == jnp.arange(C, dtype=jnp.int32)[:, None]
              ).astype(jnp.float32)                       # [C, C*D] 0/1 selector

    grid = (B_pad // tile,)
    cost = pl.CostEstimate(
        flops=int(4 * B_pad * C * CD + 8 * B_pad * CD),
        transcendentals=0,
        bytes_accessed=int(4 * (B_pad * C + B_pad * CD + C * CD + 2 * CD + C)),
    )

    out_flat = pl.pallas_call(
        stype_encoder_kernel,
        out_shape=jax.ShapeDtypeStruct((B_pad, CD), out_dtype),
        grid_spec=pltpu.PrefetchScalarGridSpec(
            num_scalar_prefetch=0,
            grid=grid,
            in_specs=[
                pl.BlockSpec((tile, C), lambda i: (i, 0)),    # feat tile
                pl.BlockSpec((1, C), lambda i: (0, 0)),       # column means
                pl.BlockSpec((C, CD), lambda i: (0, 0)),      # 0/1 selector
                pl.BlockSpec((1, CD), lambda i: (0, 0)),      # W (flattened)
                pl.BlockSpec((1, CD), lambda i: (0, 0)),      # bias (flattened)
            ],
            out_specs=pl.BlockSpec((tile, CD), lambda i: (i, 0)),
        ),
        compiler_params=pltpu.CompilerParams(
            dimension_semantics=("parallel",),
            vmem_limit_bytes=int(vmem_budget),
        ),
        cost_estimate=cost,
    )(feat, mean2d, expand, wflat, bflat)

    if B_pad != B:
        out_flat = out_flat[:B]
    return out_flat.reshape(B, C, D)   # free: [B, C*D] row-major == [B, C, D]


def reference_forward(feat, col_means, weight, bias):
    """Pure-JAX reference mirroring StypeEncoder.forward semantics."""
    feat = jnp.where(jnp.isnan(feat), col_means[None, :], feat)
    x = feat[:, :, None] * weight[None, :, :] + bias[None, :, :]
    x = jnp.nan_to_num(x, nan=0.0)     # also clamps +/-inf, like torch's default
    return x                           # post_module is None


if __name__ == "__main__":
    key = jax.random.PRNGKey(0)
    k_feat, k_nan, k_w, k_b, k_mean = jax.random.split(key, 5)

    B, C, D = 40, 8, 32                # batch, num_cols, out_channels

    feat = jax.random.normal(k_feat, (B, C), dtype=jnp.float32)
    nan_mask = jax.random.uniform(k_nan, (B, C)) < 0.2
    feat = jnp.where(nan_mask, jnp.nan, feat)          # exercise MEAN imputation

    col_means = jax.random.normal(k_mean, (C,), dtype=jnp.float32)  # StatType.MEAN
    weight = 0.1 * jax.random.normal(k_w, (C, D), dtype=jnp.float32)
    bias = 0.1 * jax.random.normal(k_b, (C, D), dtype=jnp.float32)

    # TODO(synk): encode_forward is abstract in StypeEncoder; the LinearEncoder
    # (numerical stype) realization is used.  _MultiTensor inputs and the other
    # NA strategies (constant fills) are not covered by this kernel.

    ref = reference_forward(feat, col_means, weight, bias)

    # Auto-derived (VMEM-sized) batch tile.
    out = stype_encoder_forward(feat, col_means, weight, bias)
    out = jax.block_until_ready(out)
    assert out.shape == (B, C, D)
    assert jnp.allclose(out, ref, atol=1e-4, rtol=1e-4)
    assert not jnp.isnan(out).any()

    # Explicit small tile: exercises grid > 1 and the pad/slice path (40 % 16 != 0).
    out_tiled = stype_encoder_forward(feat, col_means, weight, bias, batch_tile=16)
    out_tiled = jax.block_until_ready(out_tiled)
    assert jnp.allclose(out_tiled, ref, atol=1e-4, rtol=1e-4)

    print("KERNEL_OK")
</pallas_src>

<mosaic_0001>
module attributes {stable_mosaic.version = 11 : i64} {
  func.func @stype_encoder_kernel(%arg0: i32, %arg1: memref<40x8xf32, #tpu.memory_space<vmem>>, %arg2: memref<1x8xf32, #tpu.memory_space<vmem>>, %arg3: memref<8x256xf32, #tpu.memory_space<vmem>>, %arg4: memref<1x256xf32, #tpu.memory_space<vmem>>, %arg5: memref<1x256xf32, #tpu.memory_space<vmem>>, %arg6: memref<40x256xf32, #tpu.memory_space<vmem>>) attributes {dimension_semantics = [#tpu.dimension_semantics<parallel>], iteration_bounds = array<i64: 1>, scalar_prefetch = 0 : i64, scratch_operands = 0 : i64, tpu.core_type = #tpu.core_type<tc>, window_params = [{transform_indices = @transform_0, window_bounds = array<i64: 40, 8>}, {pipeline_mode = #tpu.pipeline_mode<synchronous>, transform_indices = @transform_1, window_bounds = array<i64: 1, 8>}, {pipeline_mode = #tpu.pipeline_mode<synchronous>, transform_indices = @transform_2, window_bounds = array<i64: 8, 256>}, {pipeline_mode = #tpu.pipeline_mode<synchronous>, transform_indices = @transform_3, window_bounds = array<i64: 1, 256>}, {pipeline_mode = #tpu.pipeline_mode<synchronous>, transform_indices = @transform_4, window_bounds = array<i64: 1, 256>}, {transform_indices = @transform_5, window_bounds = array<i64: 40, 256>}]} {
    %c0 = arith.constant 0 : index
    %c0_0 = arith.constant 0 : index
    %0 = vector.load %arg1[%c0, %c0_0] : memref<40x8xf32, #tpu.memory_space<vmem>>, vector<40x8xf32>
    %1 = arith.cmpf one, %0, %0 : vector<40x8xf32>
    %c0_1 = arith.constant 0 : index
    %c0_2 = arith.constant 0 : index
    %2 = vector.load %arg2[%c0_1, %c0_2] : memref<1x8xf32, #tpu.memory_space<vmem>>, vector<1x8xf32>
    %3 = vector.shape_cast %2 : vector<1x8xf32> to vector<1x8xf32>
    %4 = vector.broadcast %3 : vector<1x8xf32> to vector<40x8xf32>
    %5 = arith.select %1, %4, %0 : vector<40x8xi1>, vector<40x8xf32>
    %cst = arith.constant -3.38953139E+38 : f32
    %cst_3 = arith.constant 3.38953139E+38 : f32
    %6 = vector.broadcast %cst : f32 to vector<40x8xf32>
    %7 = arith.maximumf %6, %5 : vector<40x8xf32>
    %8 = vector.broadcast %cst_3 : f32 to vector<40x8xf32>
    %9 = arith.minimumf %8, %7 : vector<40x8xf32>
    %c0_4 = arith.constant 0 : index
    %c0_5 = arith.constant 0 : index
    %10 = vector.load %arg3[%c0_4, %c0_5] : memref<8x256xf32, #tpu.memory_space<vmem>>, vector<8x256xf32>
    %11 = arith.truncf %9 : vector<40x8xf32> to vector<40x8xbf16>
    %12 = arith.extf %11 : vector<40x8xbf16> to vector<40x8xf32>
    %13 = arith.subf %9, %12 : vector<40x8xf32>
    %cst_6 = arith.constant dense<0.000000e+00> : vector<40x256xf32>
    %14 = tpu.matmul %12, %10, %cst_6 {dimension_numbers = #tpu.dot_dimension_numbers<[1], [0], [0], [1], [0, 0, 1, 1], [], []>} : vector<40x8xf32>, vector<8x256xf32>, vector<40x256xf32> -> vector<40x256xf32>
    %cst_7 = arith.constant dense<0.000000e+00> : vector<40x256xf32>
    %15 = tpu.matmul %13, %10, %cst_7 {dimension_numbers = #tpu.dot_dimension_numbers<[1], [0], [0], [1], [0, 0, 1, 1], [], []>} : vector<40x8xf32>, vector<8x256xf32>, vector<40x256xf32> -> vector<40x256xf32>
    %16 = arith.addf %14, %15 : vector<40x256xf32>
    %c0_8 = arith.constant 0 : index
    %c0_9 = arith.constant 0 : index
    %17 = vector.load %arg4[%c0_8, %c0_9] : memref<1x256xf32, #tpu.memory_space<vmem>>, vector<1x256xf32>
    %18 = vector.broadcast %17 : vector<1x256xf32> to vector<40x256xf32>
    %19 = arith.mulf %16, %18 : vector<40x256xf32>
    %c0_10 = arith.constant 0 : index
    %c0_11 = arith.constant 0 : index
    %20 = vector.load %arg5[%c0_10, %c0_11] : memref<1x256xf32, #tpu.memory_space<vmem>>, vector<1x256xf32>
    %21 = vector.broadcast %20 : vector<1x256xf32> to vector<40x256xf32>
    %22 = arith.addf %19, %21 : vector<40x256xf32>
    %23 = arith.cmpf one, %22, %22 : vector<40x256xf32>
    %cst_12 = arith.constant 0.000000e+00 : f32
    %24 = vector.broadcast %cst_12 : f32 to vector<40x256xf32>
    %25 = arith.select %23, %24, %22 : vector<40x256xi1>, vector<40x256xf32>
    %cst_13 = arith.constant -3.40282347E+38 : f32
    %cst_14 = arith.constant 3.40282347E+38 : f32
    %26 = vector.broadcast %cst_13 : f32 to vector<40x256xf32>
    %27 = arith.maximumf %26, %25 : vector<40x256xf32>
    %28 = vector.broadcast %cst_14 : f32 to vector<40x256xf32>
    %29 = arith.minimumf %28, %27 : vector<40x256xf32>
    %c0_15 = arith.constant 0 : index
    %c0_16 = arith.constant 0 : index
    %30 = vector.load %arg6[%c0_15, %c0_16] : memref<40x256xf32, #tpu.memory_space<vmem>>, vector<40x256xf32>
    tpu.vector_store %arg6[%c0_15, %c0_16], %29 {strides = array<i32>} : memref<40x256xf32, #tpu.memory_space<vmem>>, vector<40x256xf32>,
    return
  }
  func.func @transform_0(%arg0: i32) -> (i32, i32) {
    %c0_i32 = arith.constant 0 : i32
    %c0_i32_0 = arith.constant 0 : i32
    return %arg0, %c0_i32 : i32, i32
  }
  func.func @transform_1(%arg0: i32) -> (i32, i32) {
    %c0_i32 = arith.constant 0 : i32
    %c0_i32_0 = arith.constant 0 : i32
    %c0_i32_1 = arith.constant 0 : i32
    return %c0_i32, %c0_i32_0 : i32, i32
  }
  func.func @transform_2(%arg0: i32) -> (i32, i32) {
    %c0_i32 = arith.constant 0 : i32
    %c0_i32_0 = arith.constant 0 : i32
    %c0_i32_1 = arith.constant 0 : i32
    return %c0_i32, %c0_i32_0 : i32, i32
  }
  func.func @transform_3(%arg0: i32) -> (i32, i32) {
    %c0_i32 = arith.constant 0 : i32
    %c0_i32_0 = arith.constant 0 : i32
    %c0_i32_1 = arith.constant 0 : i32
    return %c0_i32, %c0_i32_0 : i32, i32
  }
  func.func @transform_4(%arg0: i32) -> (i32, i32) {
    %c0_i32 = arith.constant 0 : i32
    %c0_i32_0 = arith.constant 0 : i32
    %c0_i32_1 = arith.constant 0 : i32
    return %c0_i32, %c0_i32_0 : i32, i32
  }
  func.func @transform_5(%arg0: i32) -> (i32, i32) {
    %c0_i32 = arith.constant 0 : i32
    %c0_i32_0 = arith.constant 0 : i32
    return %arg0, %c0_i32 : i32, i32
  }
}

</mosaic_0001>

<llo_original>
// kernel: tpu_custom_call.1
$region0: #{tpu_custom_call.1}
  #allocation0 [shape = 'u32[]', space=smem, size = 0x4, offset = 0x4, fixed_abs, tag = 'smem constant byte address 0x4 - core index']
  #allocation1 [shape = 'u32[144,128]{1,0:T(1,128)}', space=vmem, size = 0x12000, scoped, tag = 'internal scratch']
  %s0 = inlined_call_operand.vmem [shape: f32[40,8], index: 0, kind: input, shape index: {}]
  %s1 = inlined_call_operand.vmem [shape: f32[1,8], index: 1, kind: input, shape index: {}]
  %s2 = inlined_call_operand.vmem [shape: f32[8,256], index: 2, kind: input, shape index: {}]
  %s3 = inlined_call_operand.vmem [shape: f32[1,256], index: 3, kind: input, shape index: {}]
  %s4 = inlined_call_operand.vmem [shape: f32[1,256], index: 4, kind: input, shape index: {}]
  %s5 = inlined_call_operand.hbm [shape: f32[40,256], index: 5, kind: output, shape index: {}]
  %s6 = sld [smem:[#allocation0]]
  $region30: #{tpu_custom_call.1} parent=0
    _
  %s8 = ssub.s32 1, %s6
  %s9 = scalar_select 0, %s8, %s6
  $region1: #{tpu_custom_call.1} parent=0
    #allocation2 [shape = 'u8[40960]{0}', space=vmem, size = 0xa000, scoped, tag = 'output window, operand 0, single buffered']
    #allocation3 [shape = 's32[1]{0}', space=sflag, size = 0x4, scoped, tag = 'scoped memory for tpu_custom_call.1']
    %10 = vsyncpa [#allocation3], 0
    // Predicated region
    $region2: #{tpu_custom_call.1} parent=1 // pred_check
      _
    $region3: #{tpu_custom_call.1} parent=1 // pred_check_branch
      %12 = sbr.rel (0) target = $region5
    $region4: #{tpu_custom_call.1} parent=1 // pred_region
      _
    $region5: #{tpu_custom_call.1} parent=1 // pred_fallthru
      _
    // Predicated region
    $region6: #{tpu_custom_call.1} parent=1 // pred_check
      _
    $region7: #{tpu_custom_call.1} parent=1 // pred_check_branch
      %14 = sbr.rel (0) target = $region9
    $region8: #{tpu_custom_call.1} parent=1 // pred_region
      _
    $region9: #{tpu_custom_call.1} parent=1 // pred_fallthru
      _
    // Predicated region
    $region10: #{tpu_custom_call.1} parent=1 // pred_check
      _
    $region11: #{tpu_custom_call.1} parent=1 // pred_check_branch
      %16 = sbr.rel (0) target = $region13
    $region12: #{tpu_custom_call.1} parent=1 // pred_region
      _
    $region13: #{tpu_custom_call.1} parent=1 // pred_fallthru
      _
    // Predicated region
    $region14: #{tpu_custom_call.1} parent=1 // pred_check
      _
    $region15: #{tpu_custom_call.1} parent=1 // pred_check_branch
      %18 = sbr.rel (0) target = $region17
    $region16: #{tpu_custom_call.1} parent=1 // pred_region
      _
    $region17: #{tpu_custom_call.1} parent=1 // pred_fallthru
      _
    // Predicated region
    $region18: #{tpu_custom_call.1} parent=1 // pred_check
      _
    $region19: #{tpu_custom_call.1} parent=1 // pred_check_branch
      %20 = sbr.rel (0) target = $region21
    $region20: #{tpu_custom_call.1} parent=1 // pred_region
      _
    $region21: #{tpu_custom_call.1} parent=1 // pred_fallthru
      _
    %v21 = vld [vmem:[%s0] sm:$0xff]
    %v22 = vld [vmem:[%s0 + $0x8] sm:$0xff]
    %v23 = vld [vmem:[%s0 + $0x10] sm:$0xff]
    %v24 = vld [vmem:[%s0 + $0x18] sm:$0xff]
    %v25 = vld [vmem:[%s0 + $0x20] sm:$0xff]
    %vm26 = vcmp.ne.f32.partialorder %v21, %v21
    %vm27 = vcmp.ne.f32.partialorder %v22, %v22
    %vm28 = vcmp.ne.f32.partialorder %v23, %v23
    %vm29 = vcmp.ne.f32.partialorder %v24, %v24
    %vm30 = vcmp.ne.f32.partialorder %v25, %v25
    %v31 = vld [vmem:[%s1] sm:$0x1]
    %v33 = vlaneseq
    %v34 = vshrl.u32 %v33, 7
    %v35 = vsub.s32 0, %v34
    %v36 = vrot.slane %v31, %v35
    %v38 = vsel %vm26, %v36, %v21
    %v39 = vsel %vm27, %v36, %v22
    %v40 = vsel %vm28, %v36, %v23
    %v41 = vsel %vm29, %v36, %v24
    %v42 = vsel %vm30, %v36, %v25
    %v43 = vmax.f32 %v38, -3.3895314e+38
    %v44 = vmax.f32 %v39, -3.3895314e+38
    %v45 = vmax.f32 %v40, -3.3895314e+38
    %v46 = vmax.f32 %v41, -3.3895314e+38
    %v47 = vmax.f32 %v42, -3.3895314e+38
    %v48 = vmin.f32 %v43, 3.3895314e+38
    %v49 = vmin.f32 %v44, 3.3895314e+38
    %v50 = vmin.f32 %v45, 3.3895314e+38
    %v51 = vmin.f32 %v46, 3.3895314e+38
    %v52 = vmin.f32 %v47, 3.3895314e+38
    %v53 = vld [vmem:[%s2] sm:$0xff]
    %v54 = vld [vmem:[%s2 + $0x8] sm:$0xff]
    %v55 = vpack.c.bf16 %v49, %v48
    %v56 = vpack.c.bf16 %v51, %v50
    %v57 = vpack.c.bf16 %v52, %v52
    %v58 = vunpack.c.l.bf16 %v55
    %v59 = vunpack.c.h.bf16 %v55
    %v60 = vunpack.c.l.bf16 %v56
    %v61 = vunpack.c.h.bf16 %v56
    %v62 = vunpack.c.l.bf16 %v57
    %v63 = vsub.f32 %v48, %v58
    %v64 = vsub.f32 %v49, %v59
    %v65 = vsub.f32 %v50, %v60
    %v66 = vsub.f32 %v51, %v61
    %v67 = vsub.f32 %v52, %v62
    %vm68 = vcmask 64512
    %v70 = vsel %vm68, %v63, 0
    %v73 = vsel %vm68, %v64, 0
    %v76 = vsel %vm68, %v65, 0
    %v79 = vsel %vm68, %v66, 0
    %v82 = vsel %vm68, %v67, 0
    %84 = vmatprep.subr.mxu0 0.0
    %85 = vmatpush1.msra.mxu0 0.0
    %86 = vmatprep.subr.mxu0 0.0
    %87 = vmatpush1.msra.mxu0 0.0
    %88 = vmatprep.subr.mxu0 0.0
    %89 = vmatpush1.msra.mxu0 0.0
    %90 = vmatprep.subr.mxu0 0.0
    %91 = vmatpush1.msra.mxu0 0.0
    %92 = vmatprep.subr.mxu0 0.0
    %93 = vmatpush1.msra.mxu0 0.0
    %94 = vmatprep.subr.mxu0 0.0
    %95 = vmatpush1.msra.mxu0 0.0
    %96 = vmatprep.subr.mxu0 0.0
    %97 = vmatpush1.msra.mxu0 0.0
    %98 = vmatprep.subr.mxu0 0.0
    %99 = vmatpush1.msra.mxu0 0.0
    %100 = vmatprep.subr.mxu0 0.0
    %101 = vmatpush1.msra.mxu0 0.0
    %102 = vmatprep.subr.mxu0 0.0
    %103 = vmatpush1.msra.mxu0 0.0
    %104 = vmatprep.subr.mxu0 0.0
    %105 = vmatpush1.msra.mxu0 0.0
    %106 = vmatprep.subr.mxu0 0.0
    %107 = vmatpush1.msra.mxu0 0.0
    %108 = vmatprep.subr.mxu0 0.0
    %109 = vmatpush1.msra.mxu0 0.0
    %110 = vmatprep.subr.mxu0 0.0
    %111 = vmatpush1.msra.mxu0 0.0
    %112 = vmatprep.subr.mxu0 0.0
    %113 = vmatpush1.msra.mxu0 0.0
    %114 = vmatprep.subr.mxu0 %v54
    %115 = vmatpush1.msra.mxu0 %v53
    %116 = vmatprep.subr.mxu0 0.0
    %117 = vmatpush2.msra.mxu0 0.0
    %118 = vmatprep.subr.mxu0 0.0
    %119 = vmatpush2.msra.mxu0 0.0
    %120 = vmatprep.subr.mxu0 0.0
    %121 = vmatpush2.msra.mxu0 0.0
    %122 = vmatprep.subr.mxu0 0.0
    %123 = vmatpush2.msra.mxu0 0.0
    %124 = vmatprep.subr.mxu0 0.0
    %125 = vmatpush2.msra.mxu0 0.0
    %126 = vmatprep.subr.mxu0 0.0
    %127 = vmatpush2.msra.mxu0 0.0
    %128 = vmatprep.subr.mxu0 0.0
    %129 = vmatpush2.msra.mxu0 0.0
    %130 = vmatprep.subr.mxu0 0.0
    %131 = vmatpush2.msra.mxu0 0.0
    %132 = vmatprep.subr.mxu0 0.0
    %133 = vmatpush2.msra.mxu0 0.0
    %134 = vmatprep.subr.mxu0 0.0
    %135 = vmatpush2.msra.mxu0 0.0
    %136 = vmatprep.subr.mxu0 0.0
    %137 = vmatpush2.msra.mxu0 0.0
    %138 = vmatprep.subr.mxu0 0.0
    %139 = vmatpush2.msra.mxu0 0.0
    %140 = vmatprep.subr.mxu0 0.0
    %141 = vmatpush2.msra.mxu0 0.0
    %142 = vmatprep.subr.mxu0 0.0
    %143 = vmatpush2.msra.mxu0 0.0
    %144 = vmatprep.subr.mxu0 0.0
    %145 = vmatpush2.msra.mxu0 0.0
    %146 = vmatprep.subr.mxu0 0.0
    %147 = vmatpush2.msra.mxu0 0.0
    %148 = vmatprep.mubr.f32.mxu0 0.0
    %149 = vmatmul.mubr.f32.gmra.mxu0 %v70
    %v150 = vpop.f32.mrf.mxu0
    %v151 = vadd.f32 0.0, %v150
    %v152 = vpop.f32.mrf.mxu0
    %v153 = vadd.f32 0.0, %v152
    %154 = vmatprep.mubr.f32.mxu0 0.0
    %155 = vmatmul.mubr.f32.gmra.mxu0 %v73
    %v156 = vpop.f32.mrf.mxu0
    %v157 = vadd.f32 0.0, %v156
    %v158 = vpop.f32.mrf.mxu0
    %v159 = vadd.f32 0.0, %v158
    %160 = vmatprep.mubr.f32.mxu0 0.0
    %161 = vmatmul.mubr.f32.gmra.mxu0 %v76
    %v162 = vpop.f32.mrf.mxu0
    %v163 = vadd.f32 0.0, %v162
    %v164 = vpop.f32.mrf.mxu0
    %v165 = vadd.f32 0.0, %v164
    %166 = vmatprep.mubr.f32.mxu0 0.0
    %167 = vmatmul.mubr.f32.gmra.mxu0 %v79
    %v168 = vpop.f32.mrf.mxu0
    %v169 = vadd.f32 0.0, %v168
    %v170 = vpop.f32.mrf.mxu0
    %v171 = vadd.f32 0.0, %v170
    %172 = vmatprep.mubr.f32.mxu0 0.0
    %173 = vmatmul.mubr.f32.gmra.mxu0 %v82
    %v174 = vpop.f32.mrf.mxu0
    %v175 = vadd.f32 0.0, %v174
    %v176 = vpop.f32.mrf.mxu0
    %v177 = vadd.f32 0.0, %v176
    %178 = vdwg.mxu0
    %v180 = vsel %vm68, %v58, 0
    %v183 = vsel %vm68, %v59, 0
    %v186 = vsel %vm68, %v60, 0
    %v189 = vsel %vm68, %v61, 0
    %v192 = vsel %vm68, %v62, 0
    %194 = vmatprep.subr.mxu0 0.0
    %195 = vmatpush1.msra.mxu0 0.0
    %196 = vmatprep.subr.mxu0 0.0
    %197 = vmatpush1.msra.mxu0 0.0
    %198 = vmatprep.subr.mxu0 0.0
    %199 = vmatpush1.msra.mxu0 0.0
    %200 = vmatprep.subr.mxu0 0.0
    %201 = vmatpush1.msra.mxu0 0.0
    %202 = vmatprep.subr.mxu0 0.0
    %203 = vmatpush1.msra.mxu0 0.0
    %204 = vmatprep.subr.mxu0 0.0
    %205 = vmatpush1.msra.mxu0 0.0
    %206 = vmatprep.subr.mxu0 0.0
    %207 = vmatpush1.msra.mxu0 0.0
    %208 = vmatprep.subr.mxu0 0.0
    %209 = vmatpush1.msra.mxu0 0.0
    %210 = vmatprep.subr.mxu0 0.0
    %211 = vmatpush1.msra.mxu0 0.0
    %212 = vmatprep.subr.mxu0 0.0
    %213 = vmatpush1.msra.mxu0 0.0
    %214 = vmatprep.subr.mxu0 0.0
    %215 = vmatpush1.msra.mxu0 0.0
    %216 = vmatprep.subr.mxu0 0.0
    %217 = vmatpush1.msra.mxu0 0.0
    %218 = vmatprep.subr.mxu0 0.0
    %219 = vmatpush1.msra.mxu0 0.0
    %220 = vmatprep.subr.mxu0 0.0
    %221 = vmatpush1.msra.mxu0 0.0
    %222 = vmatprep.subr.mxu0 0.0
    %223 = vmatpush1.msra.mxu0 0.0
    %224 = vmatprep.subr.mxu0 %v54
    %225 = vmatpush1.msra.mxu0 %v53
    %226 = vmatprep.subr.mxu0 0.0
    %227 = vmatpush2.msra.mxu0 0.0
    %228 = vmatprep.subr.mxu0 0.0
    %229 = vmatpush2.msra.mxu0 0.0
    %230 = vmatprep.subr.mxu0 0.0
    %231 = vmatpush2.msra.mxu0 0.0
    %232 = vmatprep.subr.mxu0 0.0
    %233 = vmatpush2.msra.mxu0 0.0
    %234 = vmatprep.subr.mxu0 0.0
    %235 = vmatpush2.msra.mxu0 0.0
    %236 = vmatprep.subr.mxu0 0.0
    %237 = vmatpush2.msra.mxu0 0.0
    %238 = vmatprep.subr.mxu0 0.0
    %239 = vmatpush2.msra.mxu0 0.0
    %240 = vmatprep.subr.mxu0 0.0
    %241 = vmatpush2.msra.mxu0 0.0
    %242 = vmatprep.subr.mxu0 0.0
    %243 = vmatpush2.msra.mxu0 0.0
    %244 = vmatprep.subr.mxu0 0.0
    %245 = vmatpush2.msra.mxu0 0.0
    %246 = vmatprep.subr.mxu0 0.0
    %247 = vmatpush2.msra.mxu0 0.0
    %248 = vmatprep.subr.mxu0 0.0
    %249 = vmatpush2.msra.mxu0 0.0
    %250 = vmatprep.subr.mxu0 0.0
    %251 = vmatpush2.msra.mxu0 0.0
    %252 = vmatprep.subr.mxu0 0.0
    %253 = vmatpush2.msra.mxu0 0.0
    %254 = vmatprep.subr.mxu0 0.0
    %255 = vmatpush2.msra.mxu0 0.0
    %256 = vmatprep.subr.mxu0 0.0
    %257 = vmatpush2.msra.mxu0 0.0
    %258 = vmatprep.mubr.f32.mxu0 0.0
    %259 = vmatmul.mubr.f32.gmra.mxu0 %v180
    %v260 = vpop.f32.mrf.mxu0
    %v261 = vadd.f32 %v151, %v260
    %v262 = vpop.f32.mrf.mxu0
    %v263 = vadd.f32 %v153, %v262
    %264 = vmatprep.mubr.f32.mxu0 0.0
    %265 = vmatmul.mubr.f32.gmra.mxu0 %v183
    %v266 = vpop.f32.mrf.mxu0
    %v267 = vadd.f32 %v157, %v266
    %v268 = vpop.f32.mrf.mxu0
    %v269 = vadd.f32 %v159, %v268
    %270 = vmatprep.mubr.f32.mxu0 0.0
    %271 = vmatmul.mubr.f32.gmra.mxu0 %v186
    %v272 = vpop.f32.mrf.mxu0
    %v273 = vadd.f32 %v163, %v272
    %v274 = vpop.f32.mrf.mxu0
    %v275 = vadd.f32 %v165, %v274
    %276 = vmatprep.mubr.f32.mxu0 0.0
    %277 = vmatmul.mubr.f32.gmra.mxu0 %v189
    %v278 = vpop.f32.mrf.mxu0
    %v279 = vadd.f32 %v169, %v278
    %v280 = vpop.f32.mrf.mxu0
    %v281 = vadd.f32 %v171, %v280
    %282 = vmatprep.mubr.f32.mxu0 0.0
    %283 = vmatmul.mubr.f32.gmra.mxu0 %v192
    %v284 = vpop.f32.mrf.mxu0
    %v285 = vadd.f32 %v175, %v284
    %v286 = vpop.f32.mrf.mxu0
    %v287 = vadd.f32 %v177, %v286
    %288 = vdwg.mxu0
    %v289 = vld [vmem:[%s3] sm:$0x3]
    %v291 = vlaneseq
    %v292 = vshrl.u32 %v291, 7
    %v293 = vsub.s32 0, %v292
    %v294 = vrot.slane %v289, %v293
    %v295 = vlaneseq
    %v296 = vshrl.u32 %v295, 7
    %v297 = vsub.s32 1, %v296
    %v298 = vrot.slane %v289, %v297
    %v301 = vmul.f32 %v261, %v294
    %v302 = vmul.f32 %v263, %v298
    %v303 = vmul.f32 %v267, %v294
    %v304 = vmul.f32 %v269, %v298
    %v305 = vmul.f32 %v273, %v294
    %v306 = vmul.f32 %v275, %v298
    %v307 = vmul.f32 %v279, %v294
    %v308 = vmul.f32 %v281, %v298
    %v309 = vmul.f32 %v285, %v294
    %v310 = vmul.f32 %v287, %v298
    %v311 = vld [vmem:[%s4] sm:$0x3]
    %v313 = vlaneseq
    %v314 = vshrl.u32 %v313, 7
    %v315 = vsub.s32 0, %v314
    %v316 = vrot.slane %v311, %v315
    %v317 = vlaneseq
    %v318 = vshrl.u32 %v317, 7
    %v319 = vsub.s32 1, %v318
    %v320 = vrot.slane %v311, %v319
    %v323 = vadd.f32 %v301, %v316
    %v324 = vadd.f32 %v302, %v320
    %v325 = vadd.f32 %v303, %v316
    %v326 = vadd.f32 %v304, %v320
    %v327 = vadd.f32 %v305, %v316
    %v328 = vadd.f32 %v306, %v320
    %v329 = vadd.f32 %v307, %v316
    %v330 = vadd.f32 %v308, %v320
    %v331 = vadd.f32 %v309, %v316
    %v332 = vadd.f32 %v310, %v320
    %vm333 = vcmp.ne.f32.partialorder %v323, %v323
    %vm334 = vcmp.ne.f32.partialorder %v324, %v324
    %vm335 = vcmp.ne.f32.partialorder %v325, %v325
    %vm336 = vcmp.ne.f32.partialorder %v326, %v326
    %vm337 = vcmp.ne.f32.partialorder %v327, %v327
    %vm338 = vcmp.ne.f32.partialorder %v328, %v328
    %vm339 = vcmp.ne.f32.partialorder %v329, %v329
    %vm340 = vcmp.ne.f32.partialorder %v330, %v330
    %vm341 = vcmp.ne.f32.partialorder %v331, %v331
    %vm342 = vcmp.ne.f32.partialorder %v332, %v332
    %v343 = vsel %vm333, 0.0, %v323
    %v344 = vsel %vm334, 0.0, %v324
    %v345 = vsel %vm335, 0.0, %v325
    %v346 = vsel %vm336, 0.0, %v326
    %v347 = vsel %vm337, 0.0, %v327
    %v348 = vsel %vm338, 0.0, %v328
    %v349 = vsel %vm339, 0.0, %v329
    %v350 = vsel %vm340, 0.0, %v330
    %v351 = vsel %vm341, 0.0, %v331
    %v352 = vsel %vm342, 0.0, %v332
    %v353 = vmax.f32 %v343, -3.4028235e+38
    %v354 = vmax.f32 %v344, -3.4028235e+38
    %v355 = vmax.f32 %v345, -3.4028235e+38
    %v356 = vmax.f32 %v346, -3.4028235e+38
    %v357 = vmax.f32 %v347, -3.4028235e+38
    %v358 = vmax.f32 %v348, -3.4028235e+38
    %v359 = vmax.f32 %v349, -3.4028235e+38
    %v360 = vmax.f32 %v350, -3.4028235e+38
    %v361 = vmax.f32 %v351, -3.4028235e+38
    %v362 = vmax.f32 %v352, -3.4028235e+38
    %v363 = vmin.f32 %v353, 3.4028235e+38
    %v364 = vmin.f32 %v354, 3.4028235e+38
    %v365 = vmin.f32 %v355, 3.4028235e+38
    %v366 = vmin.f32 %v356, 3.4028235e+38
    %v367 = vmin.f32 %v357, 3.4028235e+38
    %v368 = vmin.f32 %v358, 3.4028235e+38
    %v369 = vmin.f32 %v359, 3.4028235e+38
    %v370 = vmin.f32 %v360, 3.4028235e+38
    %v371 = vmin.f32 %v361, 3.4028235e+38
    %v372 = vmin.f32 %v362, 3.4028235e+38
    %373 = vst [vmem:[#allocation2] sm:$0xff] %v363
    %374 = vst [vmem:[#allocation2 + $0x8] sm:$0xff] %v364
    %375 = vst [vmem:[#allocation2 + $0x10] sm:$0xff] %v365
    %376 = vst [vmem:[#allocation2 + $0x18] sm:$0xff] %v366
    %377 = vst [vmem:[#allocation2 + $0x20] sm:$0xff] %v367
    %378 = vst [vmem:[#allocation2 + $0x28] sm:$0xff] %v368
    %379 = vst [vmem:[#allocation2 + $0x30] sm:$0xff] %v369
    %380 = vst [vmem:[#allocation2 + $0x38] sm:$0xff] %v370
    %381 = vst [vmem:[#allocation2 + $0x40] sm:$0xff] %v371
    %382 = vst [vmem:[#allocation2 + $0x48] sm:$0xff] %v372
    // Predicated region
    $region22: #{tpu_custom_call.1} parent=1 // pred_check
      _
    $region23: #{tpu_custom_call.1} parent=1 // pred_check_branch
      %384 = sbr.rel (0) target = $region25
    $region24: #{tpu_custom_call.1} parent=1 // pred_region
      %s386 = ssub.s32 1280, 1280
      %387 = vsyncadd [#allocation3], %s386
      %s388 = sshll.u32 [#allocation2], 4
      %s389 = int_to_ptr.vmem [resolvable:$true] %s388
      %394 = dma.vmem_to_hbm [thread:$0]  %s389, 1280, %s5, [#allocation3], 256, 256, 16
    $region25: #{tpu_custom_call.1} parent=1 // pred_fallthru
      _
    // Predicated region
    $region26: #{tpu_custom_call.1} parent=1 // pred_check
      _
    $region27: #{tpu_custom_call.1} parent=1 // pred_check_branch
      %396 = sbr.rel (0) target = $region29
    $region28: #{tpu_custom_call.1} parent=1 // pred_region
      %397 = dma.done [#allocation3], 1280
    $region29: #{tpu_custom_call.1} parent=1 // pred_fallthru
      _
    %398 = vsyncpa [#allocation3], 1

</llo_original>
